<compile_context>
chip_gen: v7x
topology: tpu7x:2x2x1
jax: 0.10.0
libtpu: 0.0.40
codegen_flags: <defaults>
</compile_context>

<pallas_src>
import functools

import jax
import jax.numpy as jnp
from jax.experimental import pallas as pl
from jax.experimental.pallas import tpu as pltpu


def _cdiv(a, b):
    return (a + b - 1) // b


def _round_up(a, m):
    return _cdiv(a, m) * m


def _device_config():
    """Returns (num_tensorcores, per-input-buffer byte budget, scoped-VMEM cap)."""
    kind = ""
    try:
        kind = (jax.devices()[0].device_kind or "").lower()
    except Exception:
        pass
    if "v7" in kind:
        # 2 TCs per chip, 64 MiB physical VMEM: big blocks, but stay under cap.
        return 2, 6 * 1024 * 1024, 48 * 1024 * 1024
    if any(s in kind for s in ("v5 lite", "v5e", "v6 lite", "v6e", "v6")):
        # Single TensorCore, 128 MiB physical VMEM.
        return 1, 4 * 1024 * 1024, 64 * 1024 * 1024
    # v4/v5p megacore and unknown chips: conservative defaults.
    return 2, 4 * 1024 * 1024, 64 * 1024 * 1024


def _attn_pool_kernel(x_ref, w_ref, b_ref, o_ref, m_sc, l_sc, acc_sc, *, n_pad_t):
    # Grid = (batch_tiles, seq_tiles). The sequence (reduction) axis MUST stay
    # the innermost grid axis: the online-softmax state in scratch is reset at
    # j == 0 and finalized at j == last; reordering the grid would leak state
    # between batch tiles.
    j = pl.program_id(1)

    @pl.when(j == 0)
    def _init():
        m_sc[...] = jnp.full(m_sc.shape, -jnp.inf, dtype=m_sc.dtype)
        l_sc[...] = jnp.zeros(l_sc.shape, dtype=l_sc.dtype)
        acc_sc[...] = jnp.zeros(acc_sc.shape, dtype=acc_sc.dtype)

    w = w_ref[...].astype(jnp.float32)          # (1, H), lane-dense
    bias = b_ref[0]                             # scalar from SMEM

    # Score projection: VPU multiply + lane reduce (no N=1 MXU matmul).
    # NOTE: x_ref is loaded/cast here and again in the weighted-sum update so
    # the f32 upcast fuses into each consumer instead of materializing a full
    # f32 copy of the tile in VMEM.
    scores = jnp.sum(x_ref[...].astype(jnp.float32) * w, axis=-1) + bias  # (Bt, Tt)

    # Online softmax over the sequence axis.
    m_prev = m_sc[...]                                               # (Bt, 1)
    m_new = jnp.maximum(m_prev, jnp.max(scores, axis=-1, keepdims=True))
    alpha = jnp.exp(m_prev - m_new)                                  # (Bt, 1)
    p = jnp.exp(scores - m_new)                                      # (Bt, Tt)

    l_sc[...] = alpha * l_sc[...] + jnp.sum(p, axis=-1, keepdims=True)
    acc_sc[...] = alpha * acc_sc[...] + jnp.sum(
        x_ref[...].astype(jnp.float32) * p[:, :, None], axis=1)
    m_sc[...] = m_new

    @pl.when(j == pl.num_programs(1) - 1)
    def _finalize():
        l = l_sc[...]
        if n_pad_t > 0:
            # Zero-padded sequence rows (only ever in the last tile) score
            # exactly `bias`, contribute nothing to acc, and add
            # exp(bias - m_final) each to the denominator: subtract that once
            # here instead of masking on every step.
            l = l - jnp.float32(n_pad_t) * jnp.exp(bias - m_sc[...])
        o_ref[...] = (acc_sc[...] / l).astype(o_ref.dtype)


def attention_pool(x, w, b, *, per_buffer_bytes=None, vmem_limit_bytes=None):
    """Attention pooling over the sequence axis.

    x: (B, T, H) float32 or bfloat16
    w: (1, H)  (== nn.Linear(H, 1).weight)
    b: (1,)    float32 bias (SMEM scalar)
    returns (B, H) in x.dtype
    """
    B, T, H = x.shape
    itemsize = jnp.dtype(x.dtype).itemsize
    sublane = {4: 8, 2: 16, 1: 32}.get(itemsize, 8)

    num_tc, default_buf, vmem_cap = _device_config()
    per_buf = default_buf if per_buffer_bytes is None else per_buffer_bytes

    # ---- batch tile --------------------------------------------------------
    # Keep the output block (Bt, H) layout-legal: Bt is either the full padded
    # batch (block == array dims) or a multiple of 8.
    if num_tc >= 2 and B >= 16:
        # Ensure >= 2 batch tiles so both TensorCores get work.
        Bt = min(128, max(8, (B // 2) // 8 * 8))
    elif B > 128:
        Bt = 128
    else:
        # Single batch tile: on 1-TC chips splitting the batch only shrinks
        # blocks and adds per-step overhead with no parallelism benefit.
        Bt = B
    # TODO(synk): optional v7x path that splits the T reduction across the two
    # TensorCores for B == 1 (per-core partial m/l/acc + tiny combine).
    B_pad = _round_up(B, Bt)

    # ---- sequence tile: pure bytes budget (no fixed cap) -------------------
    bytes_per_seq_row = max(1, Bt * H * itemsize)
    rows = max(sublane, (per_buf // bytes_per_seq_row) // sublane * sublane)
    Tt = min(_round_up(T, sublane), rows)
    T_pad = _round_up(T, Tt)

    x_p = x
    if B_pad != B or T_pad != T:
        x_p = jnp.pad(x, ((0, B_pad - B), (0, T_pad - T), (0, 0)))

    grid = (B_pad // Bt, T_pad // Tt)  # reduction (seq) axis stays innermost

    block_bytes = Bt * Tt * H * itemsize
    if vmem_limit_bytes is None:
        # Double-buffered x block + scratch + internal headroom, generation cap.
        vmem_limit_bytes = min(vmem_cap,
                               max(32 * 1024 * 1024,
                                   2 * block_bytes + 16 * 1024 * 1024))

    kernel = functools.partial(_attn_pool_kernel, n_pad_t=T_pad - T)

    out = pl.pallas_call(
        kernel,
        out_shape=jax.ShapeDtypeStruct((B_pad, H), x.dtype),
        grid_spec=pltpu.PrefetchScalarGridSpec(
            num_scalar_prefetch=0,
            grid=grid,
            in_specs=[
                pl.BlockSpec((Bt, Tt, H), lambda i, j: (i, j, 0)),
                pl.BlockSpec((1, H), lambda i, j: (0, 0)),
                pl.BlockSpec(memory_space=pltpu.MemorySpace.SMEM),
            ],
            out_specs=pl.BlockSpec((Bt, H), lambda i, j: (i, 0)),
            scratch_shapes=[
                pltpu.VMEM((Bt, 1), jnp.float32),   # running max
                pltpu.VMEM((Bt, 1), jnp.float32),   # running denom
                pltpu.VMEM((Bt, H), jnp.float32),   # running weighted sum
            ],
        ),
        compiler_params=pltpu.CompilerParams(
            dimension_semantics=("parallel", "arbitrary"),
            vmem_limit_bytes=int(vmem_limit_bytes),
        ),
    )(x_p, w, b)

    if B_pad != B:
        out = out[:B]
    return out


def attention_pool_ref(x, w, b):
    # Pure-VPU reference (no MXU f32 precision lowering) for tight tolerances.
    x = x.astype(jnp.float32)
    w = w.astype(jnp.float32)
    scores = jnp.sum(x * w[0], axis=-1) + b[0]
    weights = jax.nn.softmax(scores, axis=1)
    return jnp.sum(x * weights[..., None], axis=1)


if __name__ == "__main__":
    B, T, H = 2, 8, 32
    key = jax.random.PRNGKey(0)
    kx, kw, kb = jax.random.split(key, 3)

    x = jax.random.normal(kx, (B, T, H), dtype=jnp.float32)
    # Deterministic init of nn.Linear(hidden_dim, 1) parameters.
    w = jax.random.normal(kw, (1, H), dtype=jnp.float32) * (1.0 / jnp.sqrt(H))
    b = jax.random.normal(kb, (1,), dtype=jnp.float32) * 0.01

    # float32 path (no sequence padding needed).
    out = attention_pool(x, w, b)
    out = jax.block_until_ready(out)
    ref = attention_pool_ref(x, w, b)
    assert out.shape == (B, H)
    assert out.dtype == x.dtype
    assert jnp.allclose(out, ref, atol=2e-5, rtol=2e-5), (
        f"f32 max abs err {jnp.max(jnp.abs(out - ref))}")

    # bfloat16 streaming path (halves HBM bytes; f32 accumulation in-kernel;
    # exercises the padded-sequence denominator correction since T=8 pads to
    # a 16-row bf16 tile).
    xb = x.astype(jnp.bfloat16)
    wb = w.astype(jnp.bfloat16)
    out_bf = attention_pool(xb, wb, b)
    out_bf = jax.block_until_ready(out_bf)
    ref_bf = attention_pool_ref(xb, wb, b)
    assert out_bf.shape == (B, H)
    assert jnp.allclose(out_bf.astype(jnp.float32), ref_bf,
                        atol=3e-2, rtol=3e-2), (
        f"bf16 max abs err "
        f"{jnp.max(jnp.abs(out_bf.astype(jnp.float32) - ref_bf))}")

    print("KERNEL_OK")
</pallas_src>

<mosaic_0001>
module attributes {stable_mosaic.version = 11 : i64} {
  func.func @_attn_pool_kernel(%arg0: i32, %arg1: i32, %arg2: memref<2x8x32xf32, #tpu.memory_space<vmem>>, %arg3: memref<1x32xf32, #tpu.memory_space<vmem>>, %arg4: memref<1xf32, #tpu.memory_space<smem>>, %arg5: memref<2x32xf32, #tpu.memory_space<vmem>>, %arg6: memref<2x1xf32, #tpu.memory_space<vmem>>, %arg7: memref<2x1xf32, #tpu.memory_space<vmem>>, %arg8: memref<2x32xf32, #tpu.memory_space<vmem>>) attributes {dimension_semantics = [#tpu.dimension_semantics<parallel>, #tpu.dimension_semantics<arbitrary>], iteration_bounds = array<i64: 1, 1>, scalar_prefetch = 0 : i64, scratch_operands = 3 : i64, tpu.core_type = #tpu.core_type<tc>, window_params = [{transform_indices = @transform_0, window_bounds = array<i64: 2, 8, 32>}, {pipeline_mode = #tpu.pipeline_mode<synchronous>, transform_indices = @transform_1, window_bounds = array<i64: 1, 32>}, {transform_indices = @transform_2, window_bounds = array<i64: 1>}, {transform_indices = @transform_3, window_bounds = array<i64: 2, 32>}]} {
    %c0_i32 = arith.constant 0 : i32
    %0 = arith.cmpi eq, %arg1, %c0_i32 : i32
    %1 = arith.extui %0 : i1 to i32
    %c0_i32_0 = arith.constant 0 : i32
    %2 = arith.cmpi ne, %1, %c0_i32_0 : i32
    scf.if %2 {
      %cst_26 = arith.constant 0xFF800000 : f32
      %41 = vector.broadcast %cst_26 : f32 to vector<2x1xf32>
      %c0_27 = arith.constant 0 : index
      %c0_28 = arith.constant 0 : index
      %42 = vector.load %arg6[%c0_27, %c0_28] : memref<2x1xf32, #tpu.memory_space<vmem>>, vector<2x1xf32>
      tpu.vector_store %arg6[%c0_27, %c0_28], %41 {strides = array<i32>} : memref<2x1xf32, #tpu.memory_space<vmem>>, vector<2x1xf32>,
      %cst_29 = arith.constant 0.000000e+00 : f32
      %43 = vector.broadcast %cst_29 : f32 to vector<2x1xf32>
      %c0_30 = arith.constant 0 : index
      %c0_31 = arith.constant 0 : index
      %44 = vector.load %arg7[%c0_30, %c0_31] : memref<2x1xf32, #tpu.memory_space<vmem>>, vector<2x1xf32>
      tpu.vector_store %arg7[%c0_30, %c0_31], %43 {strides = array<i32>} : memref<2x1xf32, #tpu.memory_space<vmem>>, vector<2x1xf32>,
      %cst_32 = arith.constant 0.000000e+00 : f32
      %45 = vector.broadcast %cst_32 : f32 to vector<2x32xf32>
      %c0_33 = arith.constant 0 : index
      %c0_34 = arith.constant 0 : index
      %46 = vector.load %arg8[%c0_33, %c0_34] : memref<2x32xf32, #tpu.memory_space<vmem>>, vector<2x32xf32>
      tpu.vector_store %arg8[%c0_33, %c0_34], %45 {strides = array<i32>} : memref<2x32xf32, #tpu.memory_space<vmem>>, vector<2x32xf32>,
    } else {
    }
    %c0 = arith.constant 0 : index
    %c0_1 = arith.constant 0 : index
    %3 = vector.load %arg3[%c0, %c0_1] : memref<1x32xf32, #tpu.memory_space<vmem>>, vector<1x32xf32>
    %c0_2 = arith.constant 0 : index
    %4 = memref.load %arg4[%c0_2] : memref<1xf32, #tpu.memory_space<smem>>
    %c0_3 = arith.constant 0 : index
    %c0_4 = arith.constant 0 : index
    %c0_5 = arith.constant 0 : index
    %5 = vector.load %arg2[%c0_3, %c0_4, %c0_5] : memref<2x8x32xf32, #tpu.memory_space<vmem>>, vector<2x8x32xf32>
    %6 = vector.shape_cast %3 : vector<1x32xf32> to vector<1x1x32xf32>
    %7 = vector.broadcast %6 : vector<1x1x32xf32> to vector<2x8x32xf32>
    %8 = arith.mulf %5, %7 : vector<2x8x32xf32>
    %cst = arith.constant dense<0.000000e+00> : vector<2x8xf32>
    %9 = vector.multi_reduction <add>, %8, %cst [2] : vector<2x8x32xf32> to vector<2x8xf32>
    %10 = vector.broadcast %4 : f32 to vector<2x8xf32>
    %11 = arith.addf %9, %10 : vector<2x8xf32>
    %c0_6 = arith.constant 0 : index
    %c0_7 = arith.constant 0 : index
    %12 = vector.load %arg6[%c0_6, %c0_7] : memref<2x1xf32, #tpu.memory_space<vmem>>, vector<2x1xf32>
    %cst_8 = arith.constant dense<0xFF800000> : vector<2xf32>
    %13 = vector.multi_reduction <maximumf>, %11, %cst_8 [1] : vector<2x8xf32> to vector<2xf32>
    %14 = vector.shape_cast %13 : vector<2xf32> to vector<2x1xf32>
    %15 = arith.maximumf %12, %14 : vector<2x1xf32>
    %16 = arith.subf %12, %15 : vector<2x1xf32>
    %17 = math.exp %16 : vector<2x1xf32>
    %18 = vector.broadcast %15 : vector<2x1xf32> to vector<2x8xf32>
    %19 = arith.subf %11, %18 : vector<2x8xf32>
    %20 = math.exp %19 : vector<2x8xf32>
    %c0_9 = arith.constant 0 : index
    %c0_10 = arith.constant 0 : index
    %21 = vector.load %arg7[%c0_9, %c0_10] : memref<2x1xf32, #tpu.memory_space<vmem>>, vector<2x1xf32>
    %22 = arith.mulf %17, %21 : vector<2x1xf32>
    %cst_11 = arith.constant dense<0.000000e+00> : vector<2xf32>
    %23 = vector.multi_reduction <add>, %20, %cst_11 [1] : vector<2x8xf32> to vector<2xf32>
    %24 = vector.shape_cast %23 : vector<2xf32> to vector<2x1xf32>
    %25 = arith.addf %22, %24 : vector<2x1xf32>
    %c0_12 = arith.constant 0 : index
    %c0_13 = arith.constant 0 : index
    %26 = vector.load %arg7[%c0_12, %c0_13] : memref<2x1xf32, #tpu.memory_space<vmem>>, vector<2x1xf32>
    tpu.vector_store %arg7[%c0_12, %c0_13], %25 {strides = array<i32>} : memref<2x1xf32, #tpu.memory_space<vmem>>, vector<2x1xf32>,
    %c0_14 = arith.constant 0 : index
    %c0_15 = arith.constant 0 : index
    %27 = vector.load %arg8[%c0_14, %c0_15] : memref<2x32xf32, #tpu.memory_space<vmem>>, vector<2x32xf32>
    %28 = vector.broadcast %17 : vector<2x1xf32> to vector<2x32xf32>
    %29 = arith.mulf %28, %27 : vector<2x32xf32>
    %c0_16 = arith.constant 0 : index
    %c0_17 = arith.constant 0 : index
    %c0_18 = arith.constant 0 : index
    %30 = vector.load %arg2[%c0_16, %c0_17, %c0_18] : memref<2x8x32xf32, #tpu.memory_space<vmem>>, vector<2x8x32xf32>
    %31 = vector.shape_cast %20 : vector<2x8xf32> to vector<2x8x1xf32>
    %32 = vector.broadcast %31 : vector<2x8x1xf32> to vector<2x8x32xf32>
    %33 = arith.mulf %30, %32 : vector<2x8x32xf32>
    %cst_19 = arith.constant dense<0.000000e+00> : vector<2x32xf32>
    %34 = vector.multi_reduction <add>, %33, %cst_19 [1] : vector<2x8x32xf32> to vector<2x32xf32>
    %35 = arith.addf %29, %34 : vector<2x32xf32>
    %c0_20 = arith.constant 0 : index
    %c0_21 = arith.constant 0 : index
    %36 = vector.load %arg8[%c0_20, %c0_21] : memref<2x32xf32, #tpu.memory_space<vmem>>, vector<2x32xf32>
    tpu.vector_store %arg8[%c0_20, %c0_21], %35 {strides = array<i32>} : memref<2x32xf32, #tpu.memory_space<vmem>>, vector<2x32xf32>,
    %c0_22 = arith.constant 0 : index
    %c0_23 = arith.constant 0 : index
    %37 = vector.load %arg6[%c0_22, %c0_23] : memref<2x1xf32, #tpu.memory_space<vmem>>, vector<2x1xf32>
    tpu.vector_store %arg6[%c0_22, %c0_23], %15 {strides = array<i32>} : memref<2x1xf32, #tpu.memory_space<vmem>>, vector<2x1xf32>,
    %c0_i32_24 = arith.constant 0 : i32
    %38 = arith.cmpi eq, %arg1, %c0_i32_24 : i32
    %39 = arith.extui %38 : i1 to i32
    %c0_i32_25 = arith.constant 0 : i32
    %40 = arith.cmpi ne, %39, %c0_i32_25 : i32
    scf.if %40 {
      %c0_26 = arith.constant 0 : index
      %c0_27 = arith.constant 0 : index
      %41 = vector.load %arg7[%c0_26, %c0_27] : memref<2x1xf32, #tpu.memory_space<vmem>>, vector<2x1xf32>
      %c0_28 = arith.constant 0 : index
      %c0_29 = arith.constant 0 : index
      %42 = vector.load %arg8[%c0_28, %c0_29] : memref<2x32xf32, #tpu.memory_space<vmem>>, vector<2x32xf32>
      %43 = vector.broadcast %41 : vector<2x1xf32> to vector<2x32xf32>
      %44 = arith.divf %42, %43 : vector<2x32xf32>
      %c0_30 = arith.constant 0 : index
      %c0_31 = arith.constant 0 : index
      %45 = vector.load %arg5[%c0_30, %c0_31] : memref<2x32xf32, #tpu.memory_space<vmem>>, vector<2x32xf32>
      tpu.vector_store %arg5[%c0_30, %c0_31], %44 {strides = array<i32>} : memref<2x32xf32, #tpu.memory_space<vmem>>, vector<2x32xf32>,
    } else {
    }
    return
  }
  func.func @transform_0(%arg0: i32, %arg1: i32) -> (i32, i32, i32) {
    %c0_i32 = arith.constant 0 : i32
    %c0_i32_0 = arith.constant 0 : i32
    return %arg0, %arg1, %c0_i32 : i32, i32, i32
  }
  func.func @transform_1(%arg0: i32, %arg1: i32) -> (i32, i32) {
    %c0_i32 = arith.constant 0 : i32
    %c0_i32_0 = arith.constant 0 : i32
    %c0_i32_1 = arith.constant 0 : i32
    return %c0_i32, %c0_i32_0 : i32, i32
  }
  func.func @transform_2(%arg0: i32, %arg1: i32) -> i32 {
    %c0_i32 = arith.constant 0 : i32
    %c0_i32_0 = arith.constant 0 : i32
    return %c0_i32 : i32
  }
  func.func @transform_3(%arg0: i32, %arg1: i32) -> (i32, i32) {
    %c0_i32 = arith.constant 0 : i32
    %c0_i32_0 = arith.constant 0 : i32
    return %arg0, %c0_i32 : i32, i32
  }
}

</mosaic_0001>

<llo_original>
// kernel: tpu_custom_call.1
$region0: #{tpu_custom_call.1}
  #allocation0 [shape = 'u32[]', space=smem, size = 0x4, offset = 0x4, fixed_abs, tag = 'smem constant byte address 0x4 - core index']
  #allocation1 [shape = 'u32[144,128]{1,0:T(1,128)}', space=vmem, size = 0x12000, scoped, tag = 'internal scratch']
  #allocation2 [shape = 'f32[2,1]{1,0:T(2,128)}', space=vmem, size = 0x400, scoped, tag = 'scratch operand']
  #allocation3 [shape = 'f32[2,1]{1,0:T(2,128)}', space=vmem, size = 0x400, scoped, tag = 'scratch operand']
  #allocation4 [shape = 'f32[2,32]{1,0:T(2,128)}', space=vmem, size = 0x400, scoped, tag = 'scratch operand']
  #allocation5 [shape = 'f32[1]{0:T(128)S(6)}', space=smem, size = 0x200, scoped, tag = 'scoped memory for tpu_custom_call.1']
  %s0 = inlined_call_operand.hbm [shape: f32[2,8,32], index: 0, kind: input, shape index: {}]
  %s1 = inlined_call_operand.vmem [shape: f32[1,32], index: 1, kind: input, shape index: {}]
  %s2 = inlined_call_operand.<no memory space> [shape: f32[1], index: 2, kind: input, shape index: {}]
  %s3 = inlined_call_operand.hbm [shape: f32[2,32], index: 3, kind: output, shape index: {}]
  %s4 = sld [smem:[#allocation0]]
  $region34: #{tpu_custom_call.1} parent=0
    _
  %s6 = ssub.s32 1, %s4
  %s7 = scalar_select 0, %s6, %s4
  %8 = sst [smem:[#allocation5]] %s2
  $region1: #{tpu_custom_call.1} parent=0
    #allocation6 [shape = 'u8[8192]{0}', space=vmem, size = 0x2000, scoped, tag = 'input window, operand 0, single buffered']
    #allocation7 [shape = 's32[1]{0}', space=sflag, size = 0x4, scoped, tag = 'scoped memory for tpu_custom_call.1']
    #allocation8 [shape = 's32[1]{0}', space=sflag, size = 0x4, scoped, tag = 'scoped memory for tpu_custom_call.1']
    #allocation9 [shape = 'u8[1024]{0}', space=vmem, size = 0x400, scoped, tag = 'output window, operand 0, single buffered']
    %9 = vsyncpa [#allocation7], 0
    %10 = vsyncpa [#allocation8], 0
    // Predicated region
    $region2: #{tpu_custom_call.1} parent=1 // pred_check
      _
    $region3: #{tpu_custom_call.1} parent=1 // pred_check_branch
      %12 = sbr.rel (0) target = $region5
    $region4: #{tpu_custom_call.1} parent=1 // pred_region
      %s14 = ssub.s32 256, 256
      %15 = vsyncadd [#allocation7], %s14
      %s16 = sshll.u32 [#allocation6], 4
      %s17 = int_to_ptr.vmem [resolvable:$true] %s16
      %22 = dma.hbm_to_vmem [thread:$0]  %s0, 256, %s17, [#allocation7], 128, 128, 8
    $region5: #{tpu_custom_call.1} parent=1 // pred_fallthru
      _
    // Predicated region
    $region6: #{tpu_custom_call.1} parent=1 // pred_check
      _
    $region7: #{tpu_custom_call.1} parent=1 // pred_check_branch
      %24 = sbr.rel (0) target = $region9
    $region8: #{tpu_custom_call.1} parent=1 // pred_region
      _
    $region9: #{tpu_custom_call.1} parent=1 // pred_fallthru
      _
    // Predicated region
    $region10: #{tpu_custom_call.1} parent=1 // pred_check
      _
    $region11: #{tpu_custom_call.1} parent=1 // pred_check_branch
      %26 = sbr.rel (0) target = $region13
    $region12: #{tpu_custom_call.1} parent=1 // pred_region
      _
    $region13: #{tpu_custom_call.1} parent=1 // pred_fallthru
      _
    // Predicated region
    $region14: #{tpu_custom_call.1} parent=1 // pred_check
      _
    $region15: #{tpu_custom_call.1} parent=1 // pred_check_branch
      %28 = sbr.rel (0) target = $region17
    $region16: #{tpu_custom_call.1} parent=1 // pred_region
      %29 = dma.done [#allocation7], 256
    $region17: #{tpu_custom_call.1} parent=1 // pred_fallthru
      _
    %p30 = scmp.eq.s32.totalorder 0, 0
    // Predicated region
    $region18: #{tpu_custom_call.1} parent=1 // pred_check
      %p31 = pneg %p30
    $region19: #{tpu_custom_call.1} parent=1 // pred_check_branch
      %33 = sbr.rel (%p31) target = $region21
    $region20: #{tpu_custom_call.1} parent=1 // pred_region
      %vm34 = vcmask 1024
      %35 = vst.msk [vmem:[#allocation2] sm:$0x3] %vm34, -inf
      %36 = vst.msk [vmem:[#allocation3] sm:$0x3] %vm34, 0.0
      %vm37 = vcmask 254976
      %38 = vst.msk [vmem:[#allocation4] sm:$0x3] %vm37, 0.0
    $region21: #{tpu_custom_call.1} parent=1 // pred_fallthru
      _
    %v39 = vld [vmem:[%s1] sm:$0x1]
    %s40 = sld [smem:[#allocation5]]
    %v41 = vld [vmem:[#allocation6] sm:$0xff]
    %v42 = vld [vmem:[#allocation6 + $0x8] sm:$0xff]
    %v44 = vlaneseq
    %v45 = vshrl.u32 %v44, 7
    %v46 = vsub.s32 0, %v45
    %v47 = vrot.slane %v39, %v46
    %v49 = vmul.f32 %v41, %v47
    %v50 = vmul.f32 %v42, %v47
    %vm51 = vcmask 261120
    %v52 = vsel %vm51, %v49, 0.0
    %53 = vadd.xlane.f32.xlu0 %v52
    %v54 = vpop.xlane.xlu0 %53
    %v55 = vsel %vm51, %v50, 0.0
    %56 = vadd.xlane.f32.xlu0 %v55
    %v57 = vpop.xlane.xlu0 %56
    %v58 = vstv %s40
    %v59 = vadd.f32 %v54, %v58
    %v60 = vadd.f32 %v57, %v58
    %v61 = vld [vmem:[#allocation2] sm:$0x3]
    %v64 = vlaneseq
    %v65 = vand.u32 %v64, 127
    %v66 = vlaneseq
    %v67 = vshrl.u32 %v66, 7
    %v68 = vsub.s32 %v65, %v67
    %v69 = vrot.slane %v59, %v68
    %v70 = vlaneseq
    %v71 = vshrl.u32 %v70, 7
    %v72 = vsub.s32 %v65, %v71
    %v73 = vrot.slane %v60, %v72
    %vm74 = vcmask 1041409
    %v75 = vsel %vm74, %v73, %v69
    %vm77 = vcmask 58368
    %v78 = vsel %vm77, %v75, -inf
    %79 = vmax.xlane.f32.xlu0 %v78
    %v80 = vpop.xlane.xlu0 %79
    %v81 = vmax.f32 %v61, %v80
    %v82 = vsub.f32 %v61, %v81
    %v83 = vmul.f32 %v82, 1.442695
    %v84 = vpow.pop %v83
    %86 = vset.pattern.permute.xlu0 0
    %87 = vperm.xlu0 %86, %v81
    %v88 = vpop.permute.xlu0 %87
    %v89 = vlaneseq
    %v90 = vshrl.u32 %v89, 7
    %v91 = vsub.s32 0, %v90
    %v92 = vrot.slane %v88, %v91
    %v93 = vlaneseq
    %v94 = vshrl.u32 %v93, 7
    %v95 = vsub.s32 1, %v94
    %v96 = vrot.slane %v88, %v95
    %v99 = vsub.f32 %v59, %v92
    %v100 = vsub.f32 %v60, %v96
    %v101 = vmul.f32 %v99, 1.442695
    %v102 = vpow.pop %v101
    %v103 = vmul.f32 %v100, 1.442695
    %v104 = vpow.pop %v103
    %v105 = vld [vmem:[#allocation3] sm:$0x3]
    %v106 = vmul.f32 %v84, %v105
    %109 = vset.pattern.permute.xlu0 0
    %110 = vperm.xlu0 %109, %v102
    %v111 = vpop.permute.xlu0 %110
    %112 = vset.pattern.permute.xlu0 0
    %113 = vperm.xlu0 %112, %v104
    %v114 = vpop.permute.xlu0 %113
    %v115 = vlaneseq
    %v116 = vshrl.u32 %v115, 7
    %v117 = vsub.s32 %v65, %v116
    %v118 = vrot.slane %v111, %v117
    %v119 = vlaneseq
    %v120 = vshrl.u32 %v119, 7
    %v121 = vsub.s32 %v65, %v120
    %v122 = vrot.slane %v114, %v121
    %v123 = vsel %vm74, %v122, %v118
    %v125 = vsel %vm77, %v123, 0.0
    %126 = vadd.xlane.f32.xlu0 %v125
    %v127 = vpop.xlane.xlu0 %126
    %v128 = vadd.f32 %v106, %v127
    %vm129 = vcmask 1024
    %130 = vst.msk [vmem:[#allocation3] sm:$0x3] %vm129, %v128
    %v131 = vld [vmem:[#allocation4] sm:$0x3]
    %133 = vset.pattern.permute.xlu0 0
    %134 = vperm.xlu0 %133, %v84
    %v135 = vpop.permute.xlu0 %134
    %v137 = vmul.f32 %v135, %v131
    %v138 = vld [vmem:[#allocation6] sm:$0xff]
    %v139 = vld [vmem:[#allocation6 + $0x8] sm:$0xff]
    %v142 = vmul.f32 %v138, %v111
    %v143 = vmul.f32 %v139, %v114
    %v144 = vsel %vm51, %v142, 0.0
    %v145 = vrot.slane %v144, 4
    %v146 = vadd.f32 %v144, %v145
    %v147 = vrot.slane %v146, 2
    %v148 = vadd.f32 %v146, %v147
    %v149 = vrot.slane %v148, 1
    %v150 = vadd.f32 %v148, %v149
    %v151 = vsel %vm51, %v143, 0.0
    %v152 = vrot.slane %v151, 4
    %v153 = vadd.f32 %v151, %v152
    %v154 = vrot.slane %v153, 2
    %v155 = vadd.f32 %v153, %v154
    %v156 = vrot.slane %v155, 1
    %v157 = vadd.f32 %v155, %v156
    %v160 = vsel %vm74, %v157, %v150
    %v162 = vadd.f32 %v137, %v160
    %vm163 = vcmask 254976
    %164 = vst.msk [vmem:[#allocation4] sm:$0x3] %vm163, %v162
    %165 = vst.msk [vmem:[#allocation2] sm:$0x3] %vm129, %v81
    // Predicated region
    $region22: #{tpu_custom_call.1} parent=1 // pred_check
      %p166 = pneg %p30
    $region23: #{tpu_custom_call.1} parent=1 // pred_check_branch
      %168 = sbr.rel (%p166) target = $region25
    $region24: #{tpu_custom_call.1} parent=1 // pred_region
      %v169 = vld [vmem:[#allocation3] sm:$0x3]
      %v170 = vld [vmem:[#allocation4] sm:$0x3]
      %172 = vset.pattern.permute.xlu0 0
      %173 = vperm.xlu0 %172, %v169
      %v174 = vpop.permute.xlu0 %173
      %v176 = vrcp.pop %v174
      %v177 = vmul.f32 %v170, %v176
      %178 = vst.msk [vmem:[#allocation9] sm:$0x3] %vm163, %v177
    $region25: #{tpu_custom_call.1} parent=1 // pred_fallthru
      _
    // Predicated region
    $region26: #{tpu_custom_call.1} parent=1 // pred_check
      _
    $region27: #{tpu_custom_call.1} parent=1 // pred_check_branch
      %180 = sbr.rel (0) target = $region29
    $region28: #{tpu_custom_call.1} parent=1 // pred_region
      %s182 = ssub.s32 32, 32
      %183 = vsyncadd [#allocation8], %s182
      %s185 = sshll.u32 [#allocation9], 4
      %s186 = int_to_ptr.vmem [resolvable:$true] %s185
      %188 = dma.vmem_to_hbm [thread:$0]  %s186, 32, %s3, [#allocation8]
    $region29: #{tpu_custom_call.1} parent=1 // pred_fallthru
      _
    // Predicated region
    $region30: #{tpu_custom_call.1} parent=1 // pred_check
      _
    $region31: #{tpu_custom_call.1} parent=1 // pred_check_branch
      %190 = sbr.rel (0) target = $region33
    $region32: #{tpu_custom_call.1} parent=1 // pred_region
      %191 = dma.done [#allocation8], 32
    $region33: #{tpu_custom_call.1} parent=1 // pred_fallthru
      _
    %192 = vsyncpa [#allocation7], 1
    %193 = vsyncpa [#allocation8], 1

</llo_original>
